<compile_context>
chip_gen: v7x
topology: tpu7x:2x2x1
jax: 0.10.0
libtpu: 0.0.40
codegen_flags: <defaults>
</compile_context>

<pallas_src>
import functools

import jax
import jax.numpy as jnp
from jax.experimental import pallas as pl
from jax.experimental.pallas import tpu as pltpu

_LANES = 128
_SUBLANES = 8
_MAX_TILE_ROWS = 2048  # (2048, 128) f32 block = 1 MiB per input per buffer


def _make_sse_kernel(n_rows, tile_rows, blocks_per_core, needs_mask):
    """Build a kernel accumulating per-core partial sums of squared diffs.

    Output block is (1, 8, 128) and stays resident across the inner
    ("arbitrary") reduction axis; the hot loop only does VPU elementwise work.
    """

    def kernel(p_ref, l_ref, out_ref):
        c = pl.program_id(0)  # core / outer split
        i = pl.program_id(1)  # reduction step

        @pl.when(i == 0)
        def _():
            out_ref[...] = jnp.zeros_like(out_ref)

        d = p_ref[...].astype(jnp.float32) - l_ref[...].astype(jnp.float32)
        sq = d * d

        if needs_mask:
            # Zero out rows beyond the real row count (boundary / ghost blocks).
            block = c * blocks_per_core + i
            row0 = block * tile_rows
            row_ids = row0 + jax.lax.broadcasted_iota(jnp.int32, sq.shape, 0)
            sq = jnp.where(row_ids < n_rows, sq, 0.0)

        # (tile_rows, 128) -> (8, 128): elementwise vreg adds only (no XLU).
        partial = sq.reshape(tile_rows // _SUBLANES, _SUBLANES, _LANES).sum(axis=0)
        out_ref[...] += partial.reshape(1, _SUBLANES, _LANES)

    return kernel


def _sum_squared_error(pred, label):
    """Global sum of (pred - label)^2 via a Pallas TPU kernel."""
    n = pred.size
    p_flat = pred.reshape(-1)
    l_flat = label.reshape(-1)

    # Lane pad only when the element count is not a multiple of 128; both
    # inputs are zero-padded so the pad contributes 0 to the squared error.
    rem = n % _LANES
    if rem:
        pad = _LANES - rem
        p_flat = jnp.pad(p_flat, (0, pad))
        l_flat = jnp.pad(l_flat, (0, pad))
    n_rows = p_flat.shape[0] // _LANES
    p2d = p_flat.reshape(n_rows, _LANES)
    l2d = l_flat.reshape(n_rows, _LANES)

    # Sublane alignment (8 for 4-byte, 16 for 2-byte, 32 for 1-byte dtypes).
    itemsize = jnp.dtype(pred.dtype).itemsize
    row_align = max(_SUBLANES, 32 // max(itemsize, 1))
    aligned_rows = ((n_rows + row_align - 1) // row_align) * row_align
    tile_rows = min(_MAX_TILE_ROWS, aligned_rows)

    nb = pl.cdiv(n_rows, tile_rows)           # total row-blocks
    n_cores = 2 if nb >= 2 else 1             # v7x: split reduction across TCs
    blocks_per_core = pl.cdiv(nb, n_cores)
    needs_mask = (n_cores * blocks_per_core * tile_rows) != n_rows

    def in_map(c, i):
        # Clamp so ghost blocks (past the end) re-read the last in-bounds
        # block; their contribution is zeroed by the in-kernel mask.
        return (jnp.minimum(c * blocks_per_core + i, nb - 1), 0)

    partials = pl.pallas_call(
        _make_sse_kernel(n_rows, tile_rows, blocks_per_core, needs_mask),
        out_shape=jax.ShapeDtypeStruct((n_cores, _SUBLANES, _LANES), jnp.float32),
        grid_spec=pltpu.PrefetchScalarGridSpec(
            num_scalar_prefetch=0,
            grid=(n_cores, blocks_per_core),
            in_specs=[
                pl.BlockSpec((tile_rows, _LANES), in_map),
                pl.BlockSpec((tile_rows, _LANES), in_map),
            ],
            out_specs=pl.BlockSpec((1, _SUBLANES, _LANES), lambda c, i: (c, 0, 0)),
        ),
        compiler_params=pltpu.CompilerParams(
            dimension_semantics=("parallel", "arbitrary"),
        ),
    )(p2d, l2d)

    # Single small cross-lane reduce, done once outside the hot loop.
    return jnp.sum(partials)


@functools.partial(jax.jit, static_argnames=("max_val",))
def psnr_loss(pred, label, max_val=1.0):
    assert pred.shape == label.shape, "pred/label must have identical shapes"

    sse = _sum_squared_error(pred, label)
    mse = sse / jnp.float32(pred.size)  # matches F.mse_loss (global mean)

    # Match PyTorch semantics: if mse == 0 return 0.0, else -(PSNR).
    safe_mse = jnp.where(mse == 0.0, jnp.float32(1.0), mse)
    log10 = lambda v: jnp.log(v) / jnp.log(jnp.float32(10.0))
    psnr = 20.0 * log10(jnp.float32(max_val)) - 10.0 * log10(safe_mse)
    return jnp.where(mse == 0.0, jnp.float32(0.0), -psnr)


if __name__ == "__main__":
    key = jax.random.PRNGKey(0)
    k_pred, k_label = jax.random.split(key)

    # Small NCHW-like inputs, consistent with an image-restoration loss.
    shape = (2, 4, 16, 16)
    pred = jax.random.uniform(k_pred, shape, dtype=jnp.float32)
    label = jax.random.uniform(k_label, shape, dtype=jnp.float32)

    loss = psnr_loss(pred, label, max_val=1.0)
    jax.block_until_ready(loss)

    # Reference check in plain JAX (same formula as the PyTorch module).
    mse_ref = jnp.mean((pred - label) ** 2)
    ref = -(20.0 * jnp.log10(jnp.float32(1.0)) - 10.0 * jnp.log10(mse_ref))
    assert jnp.allclose(loss, ref, rtol=1e-5, atol=1e-6), (loss, ref)

    # mse == 0 branch.
    zero_loss = psnr_loss(pred, pred, max_val=1.0)
    jax.block_until_ready(zero_loss)
    assert float(zero_loss) == 0.0

    # Non-128-multiple / ragged-tail path (exercises in-kernel masking).
    shape2 = (3, 3, 11, 7)
    p2 = jax.random.uniform(k_pred, shape2, dtype=jnp.float32)
    l2 = jax.random.uniform(k_label, shape2, dtype=jnp.float32)
    loss2 = psnr_loss(p2, l2, max_val=1.0)
    jax.block_until_ready(loss2)
    ref2 = -(20.0 * jnp.log10(jnp.float32(1.0)) - 10.0 * jnp.log10(jnp.mean((p2 - l2) ** 2)))
    assert jnp.allclose(loss2, ref2, rtol=1e-5, atol=1e-6), (loss2, ref2)

    print("KERNEL_OK")
</pallas_src>

<mosaic_0001>
module attributes {stable_mosaic.version = 11 : i64} {
  func.func @kernel(%arg0: i32, %arg1: i32, %arg2: memref<16x128xf32, #tpu.memory_space<vmem>>, %arg3: memref<16x128xf32, #tpu.memory_space<vmem>>, %arg4: memref<1x8x128xf32, #tpu.memory_space<vmem>>) attributes {dimension_semantics = [#tpu.dimension_semantics<parallel>, #tpu.dimension_semantics<arbitrary>], iteration_bounds = array<i64: 1, 1>, scalar_prefetch = 0 : i64, scratch_operands = 0 : i64, tpu.core_type = #tpu.core_type<tc>, window_params = [{transform_indices = @transform_0, window_bounds = array<i64: 16, 128>}, {transform_indices = @transform_1, window_bounds = array<i64: 16, 128>}, {transform_indices = @transform_2, window_bounds = array<i64: 1, 8, 128>}]} {
    %c0_i32 = arith.constant 0 : i32
    %0 = arith.cmpi eq, %arg1, %c0_i32 : i32
    %1 = arith.extui %0 : i1 to i32
    %c0_i32_0 = arith.constant 0 : i32
    %2 = arith.cmpi ne, %1, %c0_i32_0 : i32
    scf.if %2 {
      %cst_10 = arith.constant 0.000000e+00 : f32
      %13 = vector.broadcast %cst_10 : f32 to vector<1x8x128xf32>
      %c0_11 = arith.constant 0 : index
      %c0_12 = arith.constant 0 : index
      %c0_13 = arith.constant 0 : index
      %14 = vector.load %arg4[%c0_11, %c0_12, %c0_13] : memref<1x8x128xf32, #tpu.memory_space<vmem>>, vector<1x8x128xf32>
      tpu.vector_store %arg4[%c0_11, %c0_12, %c0_13], %13 {strides = array<i32>} : memref<1x8x128xf32, #tpu.memory_space<vmem>>, vector<1x8x128xf32>,
    } else {
    }
    %c0 = arith.constant 0 : index
    %c0_1 = arith.constant 0 : index
    %3 = vector.load %arg2[%c0, %c0_1] : memref<16x128xf32, #tpu.memory_space<vmem>>, vector<16x128xf32>
    %c0_2 = arith.constant 0 : index
    %c0_3 = arith.constant 0 : index
    %4 = vector.load %arg3[%c0_2, %c0_3] : memref<16x128xf32, #tpu.memory_space<vmem>>, vector<16x128xf32>
    %5 = arith.subf %3, %4 : vector<16x128xf32>
    %6 = arith.mulf %5, %5 : vector<16x128xf32>
    %7 = vector.shape_cast %6 : vector<16x128xf32> to vector<2x8x128xf32>
    %cst = arith.constant dense<0.000000e+00> : vector<8x128xf32>
    %8 = vector.multi_reduction <add>, %7, %cst [0] : vector<2x8x128xf32> to vector<8x128xf32>
    %c0_4 = arith.constant 0 : index
    %c0_5 = arith.constant 0 : index
    %c0_6 = arith.constant 0 : index
    %9 = vector.load %arg4[%c0_4, %c0_5, %c0_6] : memref<1x8x128xf32, #tpu.memory_space<vmem>>, vector<1x8x128xf32>
    %10 = vector.shape_cast %8 : vector<8x128xf32> to vector<1x8x128xf32>
    %11 = arith.addf %9, %10 : vector<1x8x128xf32>
    %c0_7 = arith.constant 0 : index
    %c0_8 = arith.constant 0 : index
    %c0_9 = arith.constant 0 : index
    %12 = vector.load %arg4[%c0_7, %c0_8, %c0_9] : memref<1x8x128xf32, #tpu.memory_space<vmem>>, vector<1x8x128xf32>
    tpu.vector_store %arg4[%c0_7, %c0_8, %c0_9], %11 {strides = array<i32>} : memref<1x8x128xf32, #tpu.memory_space<vmem>>, vector<1x8x128xf32>,
    return
  }
  func.func @transform_0(%arg0: i32, %arg1: i32) -> (i32, i32) {
    %c1_i32 = arith.constant 1 : i32
    %0 = arith.muli %arg0, %c1_i32 : i32
    %1 = arith.addi %0, %arg1 : i32
    %c0_i32 = arith.constant 0 : i32
    %2 = arith.minsi %1, %c0_i32 : i32
    %c0_i32_0 = arith.constant 0 : i32
    %c0_i32_1 = arith.constant 0 : i32
    return %2, %c0_i32_0 : i32, i32
  }
  func.func @transform_1(%arg0: i32, %arg1: i32) -> (i32, i32) {
    %c1_i32 = arith.constant 1 : i32
    %0 = arith.muli %arg0, %c1_i32 : i32
    %1 = arith.addi %0, %arg1 : i32
    %c0_i32 = arith.constant 0 : i32
    %2 = arith.minsi %1, %c0_i32 : i32
    %c0_i32_0 = arith.constant 0 : i32
    %c0_i32_1 = arith.constant 0 : i32
    return %2, %c0_i32_0 : i32, i32
  }
  func.func @transform_2(%arg0: i32, %arg1: i32) -> (i32, i32, i32) {
    %c0_i32 = arith.constant 0 : i32
    %c0_i32_0 = arith.constant 0 : i32
    %c0_i32_1 = arith.constant 0 : i32
    return %arg0, %c0_i32, %c0_i32_0 : i32, i32, i32
  }
}

</mosaic_0001>

<llo_original>
// kernel: psnr_loss.1
$region0: #{psnr_loss.1}
  #allocation0 [shape = 'u32[]', space=smem, size = 0x4, offset = 0x4, fixed_abs, tag = 'smem constant byte address 0x4 - core index']
  #allocation1 [shape = 'u32[144,128]{1,0:T(1,128)}', space=vmem, size = 0x12000, scoped, tag = 'internal scratch']
  %s0 = inlined_call_operand.vmem [shape: f32[16,128], index: 0, kind: input, shape index: {}]
  %s1 = inlined_call_operand.vmem [shape: f32[16,128], index: 1, kind: input, shape index: {}]
  %s2 = inlined_call_operand.vmem [shape: f32[1,8,128], index: 2, kind: output, shape index: {}]
  %s3 = sld [smem:[#allocation0]]
  $region22: #{psnr_loss.1} parent=0
    _
  %s5 = ssub.s32 1, %s3
  %s6 = scalar_select 0, %s5, %s3
  // Predicated region
  $region2: #{psnr_loss.1} parent=0 // pred_check
    _
  $region3: #{psnr_loss.1} parent=0 // pred_check_branch
    %8 = sbr.rel (0) target = $region5
  $region4: #{psnr_loss.1} parent=0 // pred_region
    %s9 = sadd.s32 0, 0
    %p10 = scmp.lt.s32.totalorder %s9, 0
    %s11 = scalar_select %p10, %s9, 0
    %s12 = smul.u32 2, %s11
    %p13 = scmp.lt.s32.totalorder %s12, 1
    %s14 = scalar_select %p13, %s12, 1
    %s15 = smul.addr %s14, 8
    %s16 = scalar_lea.vmem %s0, %s15
    %s17 = sadd.s32 0, 0
    %p18 = scmp.lt.s32.totalorder %s17, 0
    %s19 = scalar_select %p18, %s17, 0
    %s20 = smul.u32 2, %s19
  $region5: #{psnr_loss.1} parent=0 // pred_fallthru
    _
  // Predicated region
  $region6: #{psnr_loss.1} parent=0 // pred_check
    _
  $region7: #{psnr_loss.1} parent=0 // pred_check_branch
    %22 = sbr.rel (0) target = $region9
  $region8: #{psnr_loss.1} parent=0 // pred_region
    %s23 = sadd.s32 0, 0
    %p24 = scmp.lt.s32.totalorder %s23, 0
    %s25 = scalar_select %p24, %s23, 0
    %s26 = smul.u32 2, %s25
    %p27 = scmp.lt.s32.totalorder %s26, 1
    %s28 = scalar_select %p27, %s26, 1
    %s29 = smul.addr %s28, 8
    %s30 = scalar_lea.vmem %s1, %s29
    %s31 = sadd.s32 0, 0
    %p32 = scmp.lt.s32.totalorder %s31, 0
    %s33 = scalar_select %p32, %s31, 0
    %s34 = smul.u32 2, %s33
  $region9: #{psnr_loss.1} parent=0 // pred_fallthru
    _
  %s35 = sadd.s32 0, 0
  %p36 = scmp.lt.s32.totalorder %s35, 0
  %s37 = scalar_select %p36, %s35, 0
  %s38 = smul.u32 2, %s37
  %p39 = scmp.lt.s32.totalorder %s38, 1
  %s40 = scalar_select %p39, %s38, 1
  %s41 = smul.addr %s40, 8
  %s42 = scalar_lea.vmem %s0, %s41
  %s43 = sadd.s32 0, 0
  %p44 = scmp.lt.s32.totalorder %s43, 0
  %s45 = scalar_select %p44, %s43, 0
  %s46 = smul.u32 2, %s45
  %p47 = scmp.lt.s32.totalorder %s46, 1
  %s48 = scalar_select %p47, %s46, 1
  %s49 = smul.addr %s48, 8
  %s50 = scalar_lea.vmem %s1, %s49
  %s51 = sadd.s32 0, 0
  %p52 = scmp.lt.s32.totalorder %s51, 0
  %s53 = scalar_select %p52, %s51, 0
  %s54 = smul.u32 2, %s53
  %p55 = scmp.lt.s32.totalorder %s54, 1
  %s56 = scalar_select %p55, %s54, 1
  %s57 = smul.addr %s56, 8
  %s58 = scalar_lea.vmem %s0, %s57
  %s59 = sadd.s32 0, 0
  %p60 = scmp.lt.s32.totalorder %s59, 0
  %s61 = scalar_select %p60, %s59, 0
  %s62 = smul.u32 2, %s61
  %s63 = sadd.s32 0, 0
  %p64 = scmp.lt.s32.totalorder %s63, 0
  %s65 = scalar_select %p64, %s63, 0
  %s66 = smul.u32 2, %s65
  %p67 = scmp.lt.s32.totalorder %s66, 1
  %s68 = scalar_select %p67, %s66, 1
  %s69 = smul.addr %s68, 8
  %s70 = scalar_lea.vmem %s1, %s69
  %s71 = sadd.s32 0, 0
  %p72 = scmp.lt.s32.totalorder %s71, 0
  %s73 = scalar_select %p72, %s71, 0
  %s74 = smul.u32 2, %s73
  %p75 = scmp.eq.s32.totalorder 0, 0
  // Predicated region
  $region10: #{psnr_loss.1} parent=0 // pred_check
    %p76 = pneg %p75
  $region11: #{psnr_loss.1} parent=0 // pred_check_branch
    %78 = sbr.rel (%p76) target = $region13
  $region12: #{psnr_loss.1} parent=0 // pred_region
    %79 = vst [vmem:[%s2] sm:$0xff] 0.0
  $region13: #{psnr_loss.1} parent=0 // pred_fallthru
    _
  %v80 = vld [vmem:[%s58] sm:$0xff]
  %v81 = vld [vmem:[%s58 + $0x8] sm:$0xff]
  %v82 = vld [vmem:[%s70] sm:$0xff]
  %v83 = vld [vmem:[%s70 + $0x8] sm:$0xff]
  %v84 = vsub.f32 %v80, %v82
  %v85 = vsub.f32 %v81, %v83
  %v86 = vmul.f32 %v84, %v84
  %v87 = vmul.f32 %v85, %v85
  %v88 = vadd.f32 %v86, %v87
  %v89 = vld [vmem:[%s2] sm:$0xff]
  %v90 = vadd.f32 %v89, %v88
  %91 = vst [vmem:[%s2] sm:$0xff] %v90
  // Predicated region
  $region14: #{psnr_loss.1} parent=0 // pred_check
    _
  $region15: #{psnr_loss.1} parent=0 // pred_check_branch
    %93 = sbr.rel (0) target = $region17
  $region16: #{psnr_loss.1} parent=0 // pred_region
    _
  $region17: #{psnr_loss.1} parent=0 // pred_fallthru
    _
  // Predicated region
  $region18: #{psnr_loss.1} parent=0 // pred_check
    _
  $region19: #{psnr_loss.1} parent=0 // pred_check_branch
    %95 = sbr.rel (0) target = $region21
  $region20: #{psnr_loss.1} parent=0 // pred_region
    _
  $region21: #{psnr_loss.1} parent=0 // pred_fallthru
    _

</llo_original>
